<compile_context>
chip_gen: v7x
topology: tpu7x:2x2x1
jax: 0.10.0
libtpu: 0.0.40
codegen_flags: <defaults>
</compile_context>

<pallas_src>
import numpy as np
import jax
import jax.numpy as jnp
from jax.experimental import pallas as pl
from jax.experimental.pallas import tpu as pltpu


# ---------------------------------------------------------------------------
# Parameter setup / glue (plain JAX / numpy, runs once at init)
# ---------------------------------------------------------------------------

def make_selector_indices(key, input_dim, output_dim):
    """Reproduces DimensionSelector.__init__ index construction (deterministic)."""
    remain = output_dim - input_dim
    scale = int(np.ceil(output_dim / input_dim) - 1)
    chunks = []
    count = 0
    for _ in range(scale):
        c = min(input_dim, remain - count)
        key, sub = jax.random.split(key)
        perm = jax.random.permutation(sub, input_dim)[:c]
        chunks.append(perm)
        count += c
    if not chunks:
        return jnp.zeros((0,), jnp.int32)
    return jnp.concatenate(chunks).astype(jnp.int32)


def compose_butterfly_matrix(weights):
    """Fold the list of PairLinear 2x2 weights (each [N//2, 2, 2]) into a single
    dense matrix M of shape [N, N] such that   y_out = y_in @ M   reproduces the
    whole view/permute/PairLinear/permute-back stage loop of the PyTorch forward.

    Stage i acts as  y[:, j] <- A[i, j] * y[:, j] + B[i, j] * y[:, j ^ (1 << i)],
    i.e. a sparse matrix S_i with S_i[j, j] = A[i, j], S_i[j^s, j] = B[i, j];
    M = S_0 @ S_1 @ ... @ S_{L-1}.  Computed once at init (hoisted out of forward).
    """
    num_stages = len(weights)
    N = int(np.asarray(weights[0]).shape[0]) * 2
    A = np.zeros((num_stages, N), np.float32)
    B = np.zeros((num_stages, N), np.float32)
    for i, W in enumerate(weights):
        W = np.asarray(W)
        s = 1 << i
        for j in range(N):
            low = j & (s - 1)
            high = j >> (i + 1)
            p = (high << i) | low          # pair index into W
            if (j >> i) & 1 == 0:          # first element of the pair
                A[i, j] = W[p, 0, 0]
                B[i, j] = W[p, 1, 0]
            else:                          # second element of the pair
                A[i, j] = W[p, 1, 1]
                B[i, j] = W[p, 0, 1]
    M = np.eye(N, dtype=np.float32)
    for i in range(num_stages):
        s = 1 << i
        S = np.zeros((N, N), np.float32)
        for j in range(N):
            S[j, j] = A[i, j]
            S[j ^ s, j] = B[i, j]
        M = M @ S                          # y @ M = ((y @ S_0) @ S_1) @ ...
    return M


def init_params(key, input_dim, output_dim, bias=False):
    mix_dim = 2 ** int(np.ceil(np.log2(max(input_dim, output_dim))))
    num_layers = int(np.ceil(np.log2(mix_dim)))
    num_halve = int(np.ceil(np.log2(mix_dim / output_dim)))
    if num_halve != 0:
        # TODO(synk): the reducer/PairLinearHalve path of the reference module adds a
        # BiasLayer(mix_dim) to an output_dim-sized tensor and fails to broadcast in
        # PyTorch, so only num_halve == 0 configurations are implemented here.
        raise NotImplementedError("only output_dim == 2**ceil(log2(max(in,out))) supported")

    key, k_sel = jax.random.split(key)
    sel_idx = None
    if input_dim != mix_dim:
        sel_idx = make_selector_indices(k_sel, input_dim, mix_dim)

    # PairLinear weights: shape [mix_dim//2, 2, 2] per stage.  The module inits them
    # to identity; here we use deterministic random values (identity + perturbation)
    # so the kernel does non-trivial work.
    weights = []
    for _ in range(num_layers):
        key, kw = jax.random.split(key)
        w = jnp.eye(2, dtype=jnp.float32)[None] + 0.5 * jax.random.normal(
            kw, (mix_dim // 2, 2, 2), dtype=jnp.float32)
        weights.append(w)

    # BiasLayer(output_dim, init_val=0) when bias=True, Identity otherwise; both are
    # a zero vector numerically at init.
    # TODO(synk): a trained (non-zero) BiasLayer would just be loaded into bias_vec.
    bias_vec = jnp.zeros((mix_dim,), jnp.float32)

    # ---- precompose + lane-pad ONCE at init (hoisted out of forward) ----
    M = compose_butterfly_matrix(weights)                      # [mix_dim, mix_dim]
    n_pad = ((mix_dim + 127) // 128) * 128                     # lane-dense output width
    M_pad = np.zeros((mix_dim, n_pad), np.float32)
    M_pad[:, :mix_dim] = M
    bias_pad = np.zeros((1, n_pad), np.float32)
    bias_pad[0, :mix_dim] = np.asarray(bias_vec)

    return dict(mix_dim=mix_dim, sel_idx=sel_idx, weights=weights,
                bias_vec=bias_vec,
                M_pad=jnp.asarray(M_pad), bias_pad=jnp.asarray(bias_pad))


# ---------------------------------------------------------------------------
# Pallas kernel: one MXU matmul + bias add per batch tile
# ---------------------------------------------------------------------------

def _mixer_matmul_kernel(x_ref, m_ref, bias_ref, o_ref):
    acc = jnp.dot(x_ref[...].astype(jnp.float32), m_ref[...],
                  preferred_element_type=jnp.float32)          # [tb, n_pad] on the MXU
    o_ref[...] = (acc + bias_ref[...]).astype(o_ref.dtype)     # lane-dense store


def pallas_mixer_forward(x_sel, M_pad, bias_pad, *, tb=256):
    """x_sel: [bs, mix_dim] (post-selector).  Returns [bs, mix_dim]."""
    bs, N = x_sel.shape
    n_pad = M_pad.shape[1]

    # Batch tiling: multiple-of-8 row tiles so the grid pipelines / shards
    # across TensorCores; pad the batch to a whole number of tiles.
    if bs >= 8:
        tb = max(8, (min(tb, bs) // 8) * 8)
    else:
        tb = bs
    bs_pad = ((bs + tb - 1) // tb) * tb
    if bs_pad != bs:
        x_sel = jnp.pad(x_sel, ((0, bs_pad - bs), (0, 0)))
    grid = (bs_pad // tb,)

    out = pl.pallas_call(
        _mixer_matmul_kernel,
        out_shape=jax.ShapeDtypeStruct((bs_pad, n_pad), x_sel.dtype),
        grid_spec=pltpu.PrefetchScalarGridSpec(
            num_scalar_prefetch=0,
            grid=grid,
            in_specs=[
                pl.BlockSpec((tb, N), lambda i: (i, 0)),        # batch tile of x
                pl.BlockSpec((N, n_pad), lambda i: (0, 0)),     # mixing matrix (resident)
                pl.BlockSpec((1, n_pad), lambda i: (0, 0)),     # bias row (resident)
            ],
            out_specs=pl.BlockSpec((tb, n_pad), lambda i: (i, 0)),
        ),
        compiler_params=pltpu.CompilerParams(
            dimension_semantics=("parallel",),                  # megacore-shard the batch
            vmem_limit_bytes=48 * 1024 * 1024,                  # safe on v7x's 64 MiB VMEM
        ),
    )(x_sel, M_pad, bias_pad)

    if bs_pad != bs or n_pad != N:
        out = out[:bs, :N]
    return out


def forward(params, x):
    """x: [bs, input_dim] -> [bs, output_dim] (output_dim == mix_dim here)."""
    if params["sel_idx"] is not None:
        x = jnp.concatenate([x, x[:, params["sel_idx"]]], axis=1)   # DimensionSelector
    return pallas_mixer_forward(x, params["M_pad"], params["bias_pad"])


# ---------------------------------------------------------------------------
# Pure-JAX reference mirroring the PyTorch forward exactly (for verification)
# ---------------------------------------------------------------------------

def ref_forward(params, x):
    bs = x.shape[0]
    if params["sel_idx"] is not None:
        x = jnp.concatenate([x, x[:, params["sel_idx"]]], axis=1)
    y = x
    for i, W in enumerate(params["weights"]):
        y = jnp.transpose(y.reshape(-1, 2, 2 ** i), (0, 2, 1)).reshape(bs, -1)
        yp = y.reshape(bs, -1, 2)
        yo = jnp.einsum("bpk,pkj->bpj", yp, W)         # BMM2x2 (row-vector * W[p])
        y = jnp.transpose(yo.reshape(-1, 2 ** i, 2), (0, 2, 1))
    y = y.reshape(bs, -1)
    return y + params["bias_vec"]                      # Identity / BiasLayer(0)


# ---------------------------------------------------------------------------

if __name__ == "__main__":
    key = jax.random.PRNGKey(0)
    input_dim, output_dim, bs = 8, 16, 128             # mix_dim = 16, 4 mixing stages

    key, k_params, k_x = jax.random.split(key, 3)
    params = init_params(k_params, input_dim, output_dim, bias=False)
    x = jax.random.normal(k_x, (bs, input_dim), dtype=jnp.float32)

    out = forward(params, x)
    out = jax.block_until_ready(out)

    ref = jax.block_until_ready(ref_forward(params, x))
    assert out.shape == (bs, output_dim), out.shape
    assert jnp.allclose(out, ref, atol=1e-4, rtol=1e-4), (
        f"max abs err = {jnp.max(jnp.abs(out - ref))}")

    print("KERNEL_OK")
</pallas_src>

<mosaic_0001>
module attributes {stable_mosaic.version = 11 : i64} {
  func.func @_mixer_matmul_kernel(%arg0: i32, %arg1: memref<128x16xf32, #tpu.memory_space<vmem>>, %arg2: memref<16x128xf32, #tpu.memory_space<vmem>>, %arg3: memref<1x128xf32, #tpu.memory_space<vmem>>, %arg4: memref<128x128xf32, #tpu.memory_space<vmem>>) attributes {dimension_semantics = [#tpu.dimension_semantics<parallel>], iteration_bounds = array<i64: 1>, scalar_prefetch = 0 : i64, scratch_operands = 0 : i64, tpu.core_type = #tpu.core_type<tc>, window_params = [{transform_indices = @transform_0, window_bounds = array<i64: 128, 16>}, {pipeline_mode = #tpu.pipeline_mode<synchronous>, transform_indices = @transform_1, window_bounds = array<i64: 16, 128>}, {pipeline_mode = #tpu.pipeline_mode<synchronous>, transform_indices = @transform_2, window_bounds = array<i64: 1, 128>}, {transform_indices = @transform_3, window_bounds = array<i64: 128, 128>}]} {
    %c0 = arith.constant 0 : index
    %c0_0 = arith.constant 0 : index
    %0 = vector.load %arg1[%c0, %c0_0] : memref<128x16xf32, #tpu.memory_space<vmem>>, vector<128x16xf32>
    %c0_1 = arith.constant 0 : index
    %c0_2 = arith.constant 0 : index
    %1 = vector.load %arg2[%c0_1, %c0_2] : memref<16x128xf32, #tpu.memory_space<vmem>>, vector<16x128xf32>
    %cst = arith.constant dense<0.000000e+00> : vector<128x128xf32>
    %2 = tpu.matmul %0, %1, %cst {dimension_numbers = #tpu.dot_dimension_numbers<[1], [0], [0], [1], [0, 0, 1, 1], [], []>} : vector<128x16xf32>, vector<16x128xf32>, vector<128x128xf32> -> vector<128x128xf32>
    %c0_3 = arith.constant 0 : index
    %c0_4 = arith.constant 0 : index
    %3 = vector.load %arg3[%c0_3, %c0_4] : memref<1x128xf32, #tpu.memory_space<vmem>>, vector<1x128xf32>
    %4 = vector.broadcast %3 : vector<1x128xf32> to vector<128x128xf32>
    %5 = arith.addf %2, %4 : vector<128x128xf32>
    %c0_5 = arith.constant 0 : index
    %c0_6 = arith.constant 0 : index
    %6 = vector.load %arg4[%c0_5, %c0_6] : memref<128x128xf32, #tpu.memory_space<vmem>>, vector<128x128xf32>
    tpu.vector_store %arg4[%c0_5, %c0_6], %5 {strides = array<i32>} : memref<128x128xf32, #tpu.memory_space<vmem>>, vector<128x128xf32>,
    return
  }
  func.func @transform_0(%arg0: i32) -> (i32, i32) {
    %c0_i32 = arith.constant 0 : i32
    %c0_i32_0 = arith.constant 0 : i32
    return %arg0, %c0_i32 : i32, i32
  }
  func.func @transform_1(%arg0: i32) -> (i32, i32) {
    %c0_i32 = arith.constant 0 : i32
    %c0_i32_0 = arith.constant 0 : i32
    %c0_i32_1 = arith.constant 0 : i32
    return %c0_i32, %c0_i32_0 : i32, i32
  }
  func.func @transform_2(%arg0: i32) -> (i32, i32) {
    %c0_i32 = arith.constant 0 : i32
    %c0_i32_0 = arith.constant 0 : i32
    %c0_i32_1 = arith.constant 0 : i32
    return %c0_i32, %c0_i32_0 : i32, i32
  }
  func.func @transform_3(%arg0: i32) -> (i32, i32) {
    %c0_i32 = arith.constant 0 : i32
    %c0_i32_0 = arith.constant 0 : i32
    return %arg0, %c0_i32 : i32, i32
  }
}

</mosaic_0001>

<llo_original>
// kernel: tpu_custom_call.1
$region0: #{tpu_custom_call.1}
  #allocation0 [shape = 'u32[]', space=smem, size = 0x4, offset = 0x4, fixed_abs, tag = 'smem constant byte address 0x4 - core index']
  #allocation1 [shape = 'u32[144,128]{1,0:T(1,128)}', space=vmem, size = 0x12000, scoped, tag = 'internal scratch']
  %s0 = inlined_call_operand.vmem [shape: f32[128,16], index: 0, kind: input, shape index: {}]
  %s1 = inlined_call_operand.vmem [shape: f32[16,128], index: 1, kind: input, shape index: {}]
  %s2 = inlined_call_operand.vmem [shape: f32[1,128], index: 2, kind: input, shape index: {}]
  %s3 = inlined_call_operand.hbm [shape: f32[128,128], index: 3, kind: output, shape index: {}]
  %s4 = sld [smem:[#allocation0]]
  $region22: #{tpu_custom_call.1} parent=0
    _
  %s6 = ssub.s32 1, %s4
  %s7 = scalar_select 0, %s6, %s4
  $region1: #{tpu_custom_call.1} parent=0
    #allocation2 [shape = 'u8[65536]{0}', space=vmem, size = 0x10000, scoped, tag = 'output window, operand 0, single buffered']
    #allocation3 [shape = 's32[1]{0}', space=sflag, size = 0x4, scoped, tag = 'scoped memory for tpu_custom_call.1']
    %8 = vsyncpa [#allocation3], 0
    // Predicated region
    $region2: #{tpu_custom_call.1} parent=1 // pred_check
      _
    $region3: #{tpu_custom_call.1} parent=1 // pred_check_branch
      %10 = sbr.rel (0) target = $region5
    $region4: #{tpu_custom_call.1} parent=1 // pred_region
      _
    $region5: #{tpu_custom_call.1} parent=1 // pred_fallthru
      _
    // Predicated region
    $region6: #{tpu_custom_call.1} parent=1 // pred_check
      _
    $region7: #{tpu_custom_call.1} parent=1 // pred_check_branch
      %12 = sbr.rel (0) target = $region9
    $region8: #{tpu_custom_call.1} parent=1 // pred_region
      _
    $region9: #{tpu_custom_call.1} parent=1 // pred_fallthru
      _
    // Predicated region
    $region10: #{tpu_custom_call.1} parent=1 // pred_check
      _
    $region11: #{tpu_custom_call.1} parent=1 // pred_check_branch
      %14 = sbr.rel (0) target = $region13
    $region12: #{tpu_custom_call.1} parent=1 // pred_region
      _
    $region13: #{tpu_custom_call.1} parent=1 // pred_fallthru
      _
    %v15 = vld [vmem:[%s0] sm:$0xff]
    %v16 = vld [vmem:[%s0 + $0x8] sm:$0xff]
    %v17 = vld [vmem:[%s0 + $0x10] sm:$0xff]
    %v18 = vld [vmem:[%s0 + $0x18] sm:$0xff]
    %v19 = vld [vmem:[%s0 + $0x20] sm:$0xff]
    %v20 = vld [vmem:[%s0 + $0x28] sm:$0xff]
    %v21 = vld [vmem:[%s0 + $0x30] sm:$0xff]
    %v22 = vld [vmem:[%s0 + $0x38] sm:$0xff]
    %v23 = vld [vmem:[%s0 + $0x40] sm:$0xff]
    %v24 = vld [vmem:[%s0 + $0x48] sm:$0xff]
    %v25 = vld [vmem:[%s0 + $0x50] sm:$0xff]
    %v26 = vld [vmem:[%s0 + $0x58] sm:$0xff]
    %v27 = vld [vmem:[%s0 + $0x60] sm:$0xff]
    %v28 = vld [vmem:[%s0 + $0x68] sm:$0xff]
    %v29 = vld [vmem:[%s0 + $0x70] sm:$0xff]
    %v30 = vld [vmem:[%s0 + $0x78] sm:$0xff]
    %v31 = vld [vmem:[%s1] sm:$0xff]
    %v32 = vld [vmem:[%s1 + $0x8] sm:$0xff]
    %v33 = vld [vmem:[%s2] sm:$0x1]
    %v35 = vlaneseq
    %v36 = vshrl.u32 %v35, 7
    %v37 = vsub.s32 0, %v36
    %v38 = vrot.slane %v33, %v37
    %vm40 = vcmask 130048
    %v42 = vsel %vm40, %v15, 0
    %v45 = vsel %vm40, %v16, 0
    %v48 = vsel %vm40, %v17, 0
    %v51 = vsel %vm40, %v18, 0
    %v54 = vsel %vm40, %v19, 0
    %v57 = vsel %vm40, %v20, 0
    %v60 = vsel %vm40, %v21, 0
    %v63 = vsel %vm40, %v22, 0
    %v66 = vsel %vm40, %v23, 0
    %v69 = vsel %vm40, %v24, 0
    %v72 = vsel %vm40, %v25, 0
    %v75 = vsel %vm40, %v26, 0
    %v78 = vsel %vm40, %v27, 0
    %v81 = vsel %vm40, %v28, 0
    %v84 = vsel %vm40, %v29, 0
    %v87 = vsel %vm40, %v30, 0
    %89 = vmatprep.subr.mxu0 0.0
    %90 = vmatpush1.msra.mxu0 %v31
    %91 = vmatprep.subr.mxu0 0.0
    %92 = vmatpush1.msra.mxu0 %v32
    %93 = vmatprep.subr.mxu0 0.0
    %94 = vmatpush1.msra.mxu0 0.0
    %95 = vmatprep.subr.mxu0 0.0
    %96 = vmatpush1.msra.mxu0 0.0
    %97 = vmatprep.subr.mxu0 0.0
    %98 = vmatpush1.msra.mxu0 0.0
    %99 = vmatprep.subr.mxu0 0.0
    %100 = vmatpush1.msra.mxu0 0.0
    %101 = vmatprep.subr.mxu0 0.0
    %102 = vmatpush1.msra.mxu0 0.0
    %103 = vmatprep.subr.mxu0 0.0
    %104 = vmatpush1.msra.mxu0 0.0
    %105 = vmatprep.subr.mxu0 0.0
    %106 = vmatpush1.msra.mxu0 0.0
    %107 = vmatprep.subr.mxu0 0.0
    %108 = vmatpush1.msra.mxu0 0.0
    %109 = vmatprep.subr.mxu0 0.0
    %110 = vmatpush1.msra.mxu0 0.0
    %111 = vmatprep.subr.mxu0 0.0
    %112 = vmatpush1.msra.mxu0 0.0
    %113 = vmatprep.subr.mxu0 0.0
    %114 = vmatpush1.msra.mxu0 0.0
    %115 = vmatprep.subr.mxu0 0.0
    %116 = vmatpush1.msra.mxu0 0.0
    %117 = vmatprep.subr.mxu0 0.0
    %118 = vmatpush1.msra.mxu0 0.0
    %119 = vmatprep.subr.mxu0 0.0
    %120 = vmatpush1.msra.mxu0 0.0
    %121 = vmatprep.subr.mxu0 0.0
    %122 = vmatpush1.msra.mxu0 0.0
    %123 = vmatprep.subr.mxu0 0.0
    %124 = vmatpush1.msra.mxu0 0.0
    %125 = vmatprep.subr.mxu0 0.0
    %126 = vmatpush1.msra.mxu0 0.0
    %127 = vmatprep.subr.mxu0 0.0
    %128 = vmatpush1.msra.mxu0 0.0
    %129 = vmatprep.subr.mxu0 0.0
    %130 = vmatpush1.msra.mxu0 0.0
    %131 = vmatprep.subr.mxu0 0.0
    %132 = vmatpush1.msra.mxu0 0.0
    %133 = vmatprep.subr.mxu0 0.0
    %134 = vmatpush1.msra.mxu0 0.0
    %135 = vmatprep.subr.mxu0 0.0
    %136 = vmatpush1.msra.mxu0 0.0
    %137 = vmatprep.subr.mxu0 0.0
    %138 = vmatpush1.msra.mxu0 0.0
    %139 = vmatprep.subr.mxu0 0.0
    %140 = vmatpush1.msra.mxu0 0.0
    %141 = vmatprep.subr.mxu0 0.0
    %142 = vmatpush1.msra.mxu0 0.0
    %143 = vmatprep.subr.mxu0 0.0
    %144 = vmatpush1.msra.mxu0 0.0
    %145 = vmatprep.subr.mxu0 0.0
    %146 = vmatpush1.msra.mxu0 0.0
    %147 = vmatprep.subr.mxu0 0.0
    %148 = vmatpush1.msra.mxu0 0.0
    %149 = vmatprep.subr.mxu0 0.0
    %150 = vmatpush1.msra.mxu0 0.0
    %151 = vmatprep.subr.mxu0 0.0
    %152 = vmatpush1.msra.mxu0 0.0
    %153 = vmatprep.mubr.f32.mxu0 0.0
    %154 = vmatmul.mubr.f32.gmra.mrb[0].mxu0 %v42
    %v155 = vpop.f32.mrb[0].mxu0
    %v156 = vadd.f32 %v38, %v155
    %v157 = vpop.f32.mrb[0].mxu0
    %158 = vmatprep.mubr.f32.mxu0 0.0
    %159 = vmatmul.mubr.f32.gmra.mrb[0].mxu0 %v45
    %v160 = vpop.f32.mrb[0].mxu0
    %v161 = vadd.f32 %v38, %v160
    %v162 = vpop.f32.mrb[0].mxu0
    %163 = vmatprep.mubr.f32.mxu0 0.0
    %164 = vmatmul.mubr.f32.gmra.mrb[0].mxu0 %v48
    %v165 = vpop.f32.mrb[0].mxu0
    %v166 = vadd.f32 %v38, %v165
    %v167 = vpop.f32.mrb[0].mxu0
    %168 = vmatprep.mubr.f32.mxu0 0.0
    %169 = vmatmul.mubr.f32.gmra.mrb[0].mxu0 %v51
    %v170 = vpop.f32.mrb[0].mxu0
    %v171 = vadd.f32 %v38, %v170
    %v172 = vpop.f32.mrb[0].mxu0
    %173 = vmatprep.mubr.f32.mxu0 0.0
    %174 = vmatmul.mubr.f32.gmra.mrb[0].mxu0 %v54
    %v175 = vpop.f32.mrb[0].mxu0
    %v176 = vadd.f32 %v38, %v175
    %v177 = vpop.f32.mrb[0].mxu0
    %178 = vmatprep.mubr.f32.mxu0 0.0
    %179 = vmatmul.mubr.f32.gmra.mrb[0].mxu0 %v57
    %v180 = vpop.f32.mrb[0].mxu0
    %v181 = vadd.f32 %v38, %v180
    %v182 = vpop.f32.mrb[0].mxu0
    %183 = vmatprep.mubr.f32.mxu0 0.0
    %184 = vmatmul.mubr.f32.gmra.mrb[0].mxu0 %v60
    %v185 = vpop.f32.mrb[0].mxu0
    %v186 = vadd.f32 %v38, %v185
    %v187 = vpop.f32.mrb[0].mxu0
    %188 = vmatprep.mubr.f32.mxu0 0.0
    %189 = vmatmul.mubr.f32.gmra.mrb[0].mxu0 %v63
    %v190 = vpop.f32.mrb[0].mxu0
    %v191 = vadd.f32 %v38, %v190
    %v192 = vpop.f32.mrb[0].mxu0
    %193 = vmatprep.mubr.f32.mxu0 0.0
    %194 = vmatmul.mubr.f32.gmra.mrb[0].mxu0 %v66
    %v195 = vpop.f32.mrb[0].mxu0
    %v196 = vadd.f32 %v38, %v195
    %v197 = vpop.f32.mrb[0].mxu0
    %198 = vmatprep.mubr.f32.mxu0 0.0
    %199 = vmatmul.mubr.f32.gmra.mrb[0].mxu0 %v69
    %v200 = vpop.f32.mrb[0].mxu0
    %v201 = vadd.f32 %v38, %v200
    %v202 = vpop.f32.mrb[0].mxu0
    %203 = vmatprep.mubr.f32.mxu0 0.0
    %204 = vmatmul.mubr.f32.gmra.mrb[0].mxu0 %v72
    %v205 = vpop.f32.mrb[0].mxu0
    %v206 = vadd.f32 %v38, %v205
    %v207 = vpop.f32.mrb[0].mxu0
    %208 = vmatprep.mubr.f32.mxu0 0.0
    %209 = vmatmul.mubr.f32.gmra.mrb[0].mxu0 %v75
    %v210 = vpop.f32.mrb[0].mxu0
    %v211 = vadd.f32 %v38, %v210
    %v212 = vpop.f32.mrb[0].mxu0
    %213 = vmatprep.mubr.f32.mxu0 0.0
    %214 = vmatmul.mubr.f32.gmra.mrb[0].mxu0 %v78
    %v215 = vpop.f32.mrb[0].mxu0
    %v216 = vadd.f32 %v38, %v215
    %v217 = vpop.f32.mrb[0].mxu0
    %218 = vmatprep.mubr.f32.mxu0 0.0
    %219 = vmatmul.mubr.f32.gmra.mrb[0].mxu0 %v81
    %v220 = vpop.f32.mrb[0].mxu0
    %v221 = vadd.f32 %v38, %v220
    %v222 = vpop.f32.mrb[0].mxu0
    %223 = vmatprep.mubr.f32.mxu0 0.0
    %224 = vmatmul.mubr.f32.gmra.mrb[0].mxu0 %v84
    %v225 = vpop.f32.mrb[0].mxu0
    %v226 = vadd.f32 %v38, %v225
    %v227 = vpop.f32.mrb[0].mxu0
    %228 = vmatprep.mubr.f32.mxu0 0.0
    %229 = vmatmul.mubr.f32.gmra.mrb[0].mxu0 %v87
    %v230 = vpop.f32.mrb[0].mxu0
    %v231 = vadd.f32 %v38, %v230
    %v232 = vpop.f32.mrb[0].mxu0
    %233 = vdwg.mxu0
    %234 = vst [vmem:[#allocation2] sm:$0xff] %v156
    %235 = vst [vmem:[#allocation2 + $0x8] sm:$0xff] %v161
    %236 = vst [vmem:[#allocation2 + $0x10] sm:$0xff] %v166
    %237 = vst [vmem:[#allocation2 + $0x18] sm:$0xff] %v171
    %238 = vst [vmem:[#allocation2 + $0x20] sm:$0xff] %v176
    %239 = vst [vmem:[#allocation2 + $0x28] sm:$0xff] %v181
    %240 = vst [vmem:[#allocation2 + $0x30] sm:$0xff] %v186
    %241 = vst [vmem:[#allocation2 + $0x38] sm:$0xff] %v191
    %242 = vst [vmem:[#allocation2 + $0x40] sm:$0xff] %v196
    %243 = vst [vmem:[#allocation2 + $0x48] sm:$0xff] %v201
    %244 = vst [vmem:[#allocation2 + $0x50] sm:$0xff] %v206
    %245 = vst [vmem:[#allocation2 + $0x58] sm:$0xff] %v211
    %246 = vst [vmem:[#allocation2 + $0x60] sm:$0xff] %v216
    %247 = vst [vmem:[#allocation2 + $0x68] sm:$0xff] %v221
    %248 = vst [vmem:[#allocation2 + $0x70] sm:$0xff] %v226
    %249 = vst [vmem:[#allocation2 + $0x78] sm:$0xff] %v231
    // Predicated region
    $region14: #{tpu_custom_call.1} parent=1 // pred_check
      _
    $region15: #{tpu_custom_call.1} parent=1 // pred_check_branch
      %251 = sbr.rel (0) target = $region17
    $region16: #{tpu_custom_call.1} parent=1 // pred_region
      %s253 = ssub.s32 2048, 2048
      %254 = vsyncadd [#allocation3], %s253
      %s255 = sshll.u32 [#allocation2], 4
      %s256 = int_to_ptr.vmem [resolvable:$true] %s255
      %261 = dma.vmem_to_hbm [thread:$0]  %s256, 2048, %s3, [#allocation3], 128, 128, 8
    $region17: #{tpu_custom_call.1} parent=1 // pred_fallthru
      _
    // Predicated region
    $region18: #{tpu_custom_call.1} parent=1 // pred_check
      _
    $region19: #{tpu_custom_call.1} parent=1 // pred_check_branch
      %263 = sbr.rel (0) target = $region21
    $region20: #{tpu_custom_call.1} parent=1 // pred_region
      %264 = dma.done [#allocation3], 2048
    $region21: #{tpu_custom_call.1} parent=1 // pred_fallthru
      _
    %265 = vsyncpa [#allocation3], 1

</llo_original>
